<compile_context>
chip_gen: v7x
topology: tpu7x:2x2x1
jax: 0.10.0
libtpu: 0.0.40
codegen_flags: <defaults>
</compile_context>

<pallas_src>
import math

import jax
import jax.numpy as jnp
from jax.experimental import pallas as pl
from jax.experimental.pallas import tpu as pltpu


def ffn_kernel(x_ref, w1a_ref, b1a_ref, w1g_ref, b1g_ref, w2_ref, b2_ref,
               o_ref, acc_ref):
    j = pl.program_id(1)

    @pl.when(j == 0)
    def _():
        acc_ref[...] = jnp.zeros_like(acc_ref)

    # bf16 operands for the MXU; accumulate in f32.
    xb = x_ref[...].astype(w1a_ref.dtype)                       # (tm, D)

    # First projection, already split into value (a) and gate (g) paths
    # -> no (tm, 2H) intermediate, no mid-array slice.
    ha = jnp.dot(xb, w1a_ref[...],
                 preferred_element_type=jnp.float32) + b1a_ref[...]   # (tm, th)
    hg = jnp.dot(xb, w1g_ref[...],
                 preferred_element_type=jnp.float32) + b1g_ref[...]   # (tm, th)

    # GEGLU with exact (erf) GELU in f32 (matches PyTorch default numerics).
    gelu_g = 0.5 * hg * (1.0 + jax.lax.erf(hg * (1.0 / math.sqrt(2.0))))
    z = ha * gelu_g                                              # (tm, th) f32

    # Second projection: accumulate this hidden-chunk's contribution.
    acc_ref[...] += jnp.dot(z.astype(w2_ref.dtype), w2_ref[...],
                            preferred_element_type=jnp.float32)  # (tm, D)

    @pl.when(j == pl.num_programs(1) - 1)
    def _():
        o_ref[...] = (acc_ref[...] + b2_ref[...]).astype(o_ref.dtype)


def _round_up(x, m):
    return (x + m - 1) // m * m


def _pick_hidden_tile(h):
    """Largest 128-aligned divisor of h that is <= 512, else h itself."""
    if h <= 512:
        return h
    for c in (512, 384, 256, 128):
        if h % c == 0:
            return c
    return h


def feed_forward(x, w1, b1, w2, b2, *, tm=256, th=None,
                 compute_dtype=jnp.bfloat16):
    """x: (B, S, D).  w1: (D, 2H), b1: (1, 2H), w2: (H, D), b2: (1, D).

    Weights are stored pre-transposed as (in, out) so the kernel does x @ W.
    """
    B, S, D = x.shape
    M = B * S
    H2 = w1.shape[1]
    H = H2 // 2

    # ---- token tiling (pad M up to a multiple of the row tile) --------------
    tm = max(8, min(_round_up(tm, 8), _round_up(M, 8)))
    Mp = _round_up(M, tm)
    n_m = Mp // tm

    x2 = x.reshape(M, D)
    if Mp != M:
        x2 = jnp.pad(x2, ((0, Mp - M), (0, 0)))

    # ---- hidden-dim tiling ---------------------------------------------------
    if th is None:
        th = _pick_hidden_tile(H)
    assert H % th == 0, "hidden tile must divide H"
    n_h = H // th

    # ---- split W1/b1 into value / gate halves; bf16 weights for the MXU -----
    w1a = w1[:, :H].astype(compute_dtype)       # value path   (D, H)
    w1g = w1[:, H:].astype(compute_dtype)       # gate path    (D, H)
    b1a = b1[:, :H].astype(jnp.float32)
    b1g = b1[:, H:].astype(jnp.float32)
    w2c = w2.astype(compute_dtype)              # (H, D)
    b2c = b2.astype(jnp.float32)                # (1, D)

    cost = pl.CostEstimate(
        flops=6 * Mp * D * H,                   # 4*M*D*H (layer 1) + 2*M*H*D (layer 2)
        transcendentals=Mp * H,                 # one erf per gate element
        bytes_accessed=(x2.size * x2.dtype.itemsize
                        + Mp * D * x.dtype.itemsize
                        + sum(a.size * a.dtype.itemsize
                              for a in (w1a, w1g, b1a, b1g, w2c, b2c))),
    )

    # Conservative per-step VMEM estimate (double-buffer everything + scratch).
    wbytes = w1a.dtype.itemsize
    est = (2 * tm * D * 4                 # x tiles
           + 2 * tm * D * 4               # out tiles
           + tm * D * 4                   # f32 accumulator
           + 2 * 2 * D * th * wbytes      # W1a + W1g
           + 2 * th * D * wbytes          # W2
           + 2 * 2 * th * 4 + 2 * D * 4)  # biases
    vmem_limit = int(min(64 * 2**20, max(32 * 2**20, 2 * est)))

    def run(single_buffer_weights):
        # Grid-constant weight/bias blocks only need one VMEM copy.
        wkw = ({"pipeline_mode": pl.Buffered(1)} if single_buffer_weights else {})
        grid_spec = pltpu.PrefetchScalarGridSpec(
            num_scalar_prefetch=0,
            grid=(n_m, n_h),
            in_specs=[
                pl.BlockSpec((tm, D), lambda i, j: (i, 0)),         # x tile (resident over j)
                pl.BlockSpec((D, th), lambda i, j: (0, j), **wkw),  # W1 value half
                pl.BlockSpec((1, th), lambda i, j: (0, j), **wkw),  # b1 value half
                pl.BlockSpec((D, th), lambda i, j: (0, j), **wkw),  # W1 gate half
                pl.BlockSpec((1, th), lambda i, j: (0, j), **wkw),  # b1 gate half
                pl.BlockSpec((th, D), lambda i, j: (j, 0), **wkw),  # W2 chunk
                pl.BlockSpec((1, D), lambda i, j: (0, 0), **wkw),   # b2
            ],
            out_specs=pl.BlockSpec((tm, D), lambda i, j: (i, 0)),   # accumulator output
            scratch_shapes=[pltpu.VMEM((tm, D), jnp.float32)],
        )
        out = pl.pallas_call(
            ffn_kernel,
            out_shape=jax.ShapeDtypeStruct((Mp, D), x.dtype),
            grid_spec=grid_spec,
            compiler_params=pltpu.CompilerParams(
                dimension_semantics=("parallel", "arbitrary"),
                vmem_limit_bytes=vmem_limit,
            ),
            cost_estimate=cost,
        )(x2, w1a, b1a, w1g, b1g, w2c, b2c)
        return jax.block_until_ready(out) if isinstance(out, jax.Array) else out

    try:
        # Single-buffer weights only when they are constant across the whole
        # grid (single hidden chunk); otherwise default double-buffering.
        out = run(single_buffer_weights=(n_h == 1))
    except Exception:
        # Fallback if this Pallas build rejects pipeline_mode / Buffered(1).
        out = run(single_buffer_weights=False)

    return out[:M].reshape(B, S, D)


def reference(x, w1, b1, w2, b2):
    """Exact f32 reference matching the PyTorch module."""
    h = jnp.einsum("bsd,dh->bsh", x, w1) + b1[0]
    H = h.shape[-1] // 2
    a, g = h[..., :H], h[..., H:]
    z = a * (0.5 * g * (1.0 + jax.lax.erf(g / math.sqrt(2.0))))
    return jnp.einsum("bsh,hd->bsd", z, w2) + b2[0]


if __name__ == "__main__":
    B, S, dim, mult = 2, 8, 32, 4
    H = dim * mult            # 128
    H2 = 2 * H                # 256

    key = jax.random.PRNGKey(0)
    kx, k1, kb1, k2, kb2 = jax.random.split(key, 5)

    x = jax.random.normal(kx, (B, S, dim), dtype=jnp.float32)
    # Deterministic init mimicking nn.Linear's uniform(-1/sqrt(fan_in), ...).
    # Stored pre-transposed as (in, out) so the kernel does x @ W directly.
    w1 = jax.random.uniform(k1, (dim, H2), minval=-1.0, maxval=1.0) / math.sqrt(dim)
    b1 = jax.random.uniform(kb1, (1, H2), minval=-1.0, maxval=1.0) / math.sqrt(dim)
    w2 = jax.random.uniform(k2, (H, dim), minval=-1.0, maxval=1.0) / math.sqrt(H)
    b2 = jax.random.uniform(kb2, (1, dim), minval=-1.0, maxval=1.0) / math.sqrt(H)

    out = feed_forward(x, w1, b1, w2, b2)
    out = jax.block_until_ready(out)

    ref = reference(x, w1, b1, w2, b2)
    assert out.shape == (B, S, dim)
    # bf16 MXU operands (f32 accumulation) vs exact-f32 reference -> use a
    # bf16-appropriate tolerance.
    err = float(jnp.max(jnp.abs(out - ref)))
    assert jnp.allclose(out, ref, atol=5e-2, rtol=5e-2), err

    print("KERNEL_OK")
</pallas_src>

<mosaic_0001>
module attributes {stable_mosaic.version = 11 : i64} {
  func.func @ffn_kernel(%arg0: i32, %arg1: i32, %arg2: memref<16x32xf32, #tpu.memory_space<vmem>>, %arg3: memref<32x128xbf16, #tpu.memory_space<vmem>>, %arg4: memref<1x128xf32, #tpu.memory_space<vmem>>, %arg5: memref<32x128xbf16, #tpu.memory_space<vmem>>, %arg6: memref<1x128xf32, #tpu.memory_space<vmem>>, %arg7: memref<128x32xbf16, #tpu.memory_space<vmem>>, %arg8: memref<1x32xf32, #tpu.memory_space<vmem>>, %arg9: memref<16x32xf32, #tpu.memory_space<vmem>>, %arg10: memref<16x32xf32, #tpu.memory_space<vmem>>) attributes {dimension_semantics = [#tpu.dimension_semantics<parallel>, #tpu.dimension_semantics<arbitrary>], iteration_bounds = array<i64: 1, 1>, scalar_prefetch = 0 : i64, scratch_operands = 1 : i64, tpu.core_type = #tpu.core_type<tc>, window_params = [{transform_indices = @transform_0, window_bounds = array<i64: 16, 32>}, {pipeline_mode = #tpu.pipeline_mode<synchronous>, transform_indices = @transform_1, window_bounds = array<i64: 32, 128>}, {pipeline_mode = #tpu.pipeline_mode<synchronous>, transform_indices = @transform_2, window_bounds = array<i64: 1, 128>}, {pipeline_mode = #tpu.pipeline_mode<synchronous>, transform_indices = @transform_3, window_bounds = array<i64: 32, 128>}, {pipeline_mode = #tpu.pipeline_mode<synchronous>, transform_indices = @transform_4, window_bounds = array<i64: 1, 128>}, {pipeline_mode = #tpu.pipeline_mode<synchronous>, transform_indices = @transform_5, window_bounds = array<i64: 128, 32>}, {pipeline_mode = #tpu.pipeline_mode<synchronous>, transform_indices = @transform_6, window_bounds = array<i64: 1, 32>}, {transform_indices = @transform_7, window_bounds = array<i64: 16, 32>}]} {
    %c0_i32 = arith.constant 0 : i32
    %0 = arith.cmpi eq, %arg1, %c0_i32 : i32
    %1 = arith.extui %0 : i1 to i32
    %c0_i32_0 = arith.constant 0 : i32
    %2 = arith.cmpi ne, %1, %c0_i32_0 : i32
    scf.if %2 {
      %cst_23 = arith.constant 0.000000e+00 : f32
      %33 = vector.broadcast %cst_23 : f32 to vector<16x32xf32>
      %c0_24 = arith.constant 0 : index
      %c0_25 = arith.constant 0 : index
      %34 = vector.load %arg10[%c0_24, %c0_25] : memref<16x32xf32, #tpu.memory_space<vmem>>, vector<16x32xf32>
      tpu.vector_store %arg10[%c0_24, %c0_25], %33 {strides = array<i32>} : memref<16x32xf32, #tpu.memory_space<vmem>>, vector<16x32xf32>,
    } else {
    }
    %c0 = arith.constant 0 : index
    %c0_1 = arith.constant 0 : index
    %3 = vector.load %arg2[%c0, %c0_1] : memref<16x32xf32, #tpu.memory_space<vmem>>, vector<16x32xf32>
    %4 = arith.truncf %3 : vector<16x32xf32> to vector<16x32xbf16>
    %c0_2 = arith.constant 0 : index
    %c0_3 = arith.constant 0 : index
    %5 = vector.load %arg3[%c0_2, %c0_3] : memref<32x128xbf16, #tpu.memory_space<vmem>>, vector<32x128xbf16>
    %cst = arith.constant dense<0.000000e+00> : vector<16x128xf32>
    %6 = tpu.matmul %4, %5, %cst {dimension_numbers = #tpu.dot_dimension_numbers<[1], [0], [0], [1], [0, 0, 1, 1], [], []>} : vector<16x32xbf16>, vector<32x128xbf16>, vector<16x128xf32> -> vector<16x128xf32>
    %c0_4 = arith.constant 0 : index
    %c0_5 = arith.constant 0 : index
    %7 = vector.load %arg4[%c0_4, %c0_5] : memref<1x128xf32, #tpu.memory_space<vmem>>, vector<1x128xf32>
    %8 = vector.broadcast %7 : vector<1x128xf32> to vector<16x128xf32>
    %9 = arith.addf %6, %8 : vector<16x128xf32>
    %c0_6 = arith.constant 0 : index
    %c0_7 = arith.constant 0 : index
    %10 = vector.load %arg5[%c0_6, %c0_7] : memref<32x128xbf16, #tpu.memory_space<vmem>>, vector<32x128xbf16>
    %cst_8 = arith.constant dense<0.000000e+00> : vector<16x128xf32>
    %11 = tpu.matmul %4, %10, %cst_8 {dimension_numbers = #tpu.dot_dimension_numbers<[1], [0], [0], [1], [0, 0, 1, 1], [], []>} : vector<16x32xbf16>, vector<32x128xbf16>, vector<16x128xf32> -> vector<16x128xf32>
    %c0_9 = arith.constant 0 : index
    %c0_10 = arith.constant 0 : index
    %12 = vector.load %arg6[%c0_9, %c0_10] : memref<1x128xf32, #tpu.memory_space<vmem>>, vector<1x128xf32>
    %13 = vector.broadcast %12 : vector<1x128xf32> to vector<16x128xf32>
    %14 = arith.addf %11, %13 : vector<16x128xf32>
    %cst_11 = arith.constant 5.000000e-01 : f32
    %15 = vector.broadcast %cst_11 : f32 to vector<16x128xf32>
    %16 = arith.mulf %15, %14 : vector<16x128xf32>
    %cst_12 = arith.constant 0.707106769 : f32
    %17 = vector.broadcast %cst_12 : f32 to vector<16x128xf32>
    %18 = arith.mulf %14, %17 : vector<16x128xf32>
    %19 = math.erf %18 : vector<16x128xf32>
    %cst_13 = arith.constant 1.000000e+00 : f32
    %20 = vector.broadcast %cst_13 : f32 to vector<16x128xf32>
    %21 = arith.addf %20, %19 : vector<16x128xf32>
    %22 = arith.mulf %16, %21 : vector<16x128xf32>
    %23 = arith.mulf %9, %22 : vector<16x128xf32>
    %c0_14 = arith.constant 0 : index
    %c0_15 = arith.constant 0 : index
    %24 = vector.load %arg10[%c0_14, %c0_15] : memref<16x32xf32, #tpu.memory_space<vmem>>, vector<16x32xf32>
    %25 = arith.truncf %23 : vector<16x128xf32> to vector<16x128xbf16>
    %c0_16 = arith.constant 0 : index
    %c0_17 = arith.constant 0 : index
    %26 = vector.load %arg7[%c0_16, %c0_17] : memref<128x32xbf16, #tpu.memory_space<vmem>>, vector<128x32xbf16>
    %cst_18 = arith.constant dense<0.000000e+00> : vector<16x32xf32>
    %27 = tpu.matmul %25, %26, %cst_18 {dimension_numbers = #tpu.dot_dimension_numbers<[1], [0], [0], [1], [0, 0, 1, 1], [], []>} : vector<16x128xbf16>, vector<128x32xbf16>, vector<16x32xf32> -> vector<16x32xf32>
    %28 = arith.addf %24, %27 : vector<16x32xf32>
    %c0_19 = arith.constant 0 : index
    %c0_20 = arith.constant 0 : index
    %29 = vector.load %arg10[%c0_19, %c0_20] : memref<16x32xf32, #tpu.memory_space<vmem>>, vector<16x32xf32>
    tpu.vector_store %arg10[%c0_19, %c0_20], %28 {strides = array<i32>} : memref<16x32xf32, #tpu.memory_space<vmem>>, vector<16x32xf32>,
    %c0_i32_21 = arith.constant 0 : i32
    %30 = arith.cmpi eq, %arg1, %c0_i32_21 : i32
    %31 = arith.extui %30 : i1 to i32
    %c0_i32_22 = arith.constant 0 : i32
    %32 = arith.cmpi ne, %31, %c0_i32_22 : i32
    scf.if %32 {
      %c0_23 = arith.constant 0 : index
      %c0_24 = arith.constant 0 : index
      %33 = vector.load %arg10[%c0_23, %c0_24] : memref<16x32xf32, #tpu.memory_space<vmem>>, vector<16x32xf32>
      %c0_25 = arith.constant 0 : index
      %c0_26 = arith.constant 0 : index
      %34 = vector.load %arg8[%c0_25, %c0_26] : memref<1x32xf32, #tpu.memory_space<vmem>>, vector<1x32xf32>
      %35 = vector.broadcast %34 : vector<1x32xf32> to vector<16x32xf32>
      %36 = arith.addf %33, %35 : vector<16x32xf32>
      %c0_27 = arith.constant 0 : index
      %c0_28 = arith.constant 0 : index
      %37 = vector.load %arg9[%c0_27, %c0_28] : memref<16x32xf32, #tpu.memory_space<vmem>>, vector<16x32xf32>
      tpu.vector_store %arg9[%c0_27, %c0_28], %36 {strides = array<i32>} : memref<16x32xf32, #tpu.memory_space<vmem>>, vector<16x32xf32>,
    } else {
    }
    return
  }
  func.func @transform_0(%arg0: i32, %arg1: i32) -> (i32, i32) {
    %c0_i32 = arith.constant 0 : i32
    %c0_i32_0 = arith.constant 0 : i32
    return %arg0, %c0_i32 : i32, i32
  }
  func.func @transform_1(%arg0: i32, %arg1: i32) -> (i32, i32) {
    %c0_i32 = arith.constant 0 : i32
    %c0_i32_0 = arith.constant 0 : i32
    return %c0_i32, %arg1 : i32, i32
  }
  func.func @transform_2(%arg0: i32, %arg1: i32) -> (i32, i32) {
    %c0_i32 = arith.constant 0 : i32
    %c0_i32_0 = arith.constant 0 : i32
    return %c0_i32, %arg1 : i32, i32
  }
  func.func @transform_3(%arg0: i32, %arg1: i32) -> (i32, i32) {
    %c0_i32 = arith.constant 0 : i32
    %c0_i32_0 = arith.constant 0 : i32
    return %c0_i32, %arg1 : i32, i32
  }
  func.func @transform_4(%arg0: i32, %arg1: i32) -> (i32, i32) {
    %c0_i32 = arith.constant 0 : i32
    %c0_i32_0 = arith.constant 0 : i32
    return %c0_i32, %arg1 : i32, i32
  }
  func.func @transform_5(%arg0: i32, %arg1: i32) -> (i32, i32) {
    %c0_i32 = arith.constant 0 : i32
    %c0_i32_0 = arith.constant 0 : i32
    return %arg1, %c0_i32 : i32, i32
  }
  func.func @transform_6(%arg0: i32, %arg1: i32) -> (i32, i32) {
    %c0_i32 = arith.constant 0 : i32
    %c0_i32_0 = arith.constant 0 : i32
    %c0_i32_1 = arith.constant 0 : i32
    return %c0_i32, %c0_i32_0 : i32, i32
  }
  func.func @transform_7(%arg0: i32, %arg1: i32) -> (i32, i32) {
    %c0_i32 = arith.constant 0 : i32
    %c0_i32_0 = arith.constant 0 : i32
    return %arg0, %c0_i32 : i32, i32
  }
}

module attributes {stable_mosaic.version = 11 : i64} {
  func.func @ffn_kernel(%arg0: i32, %arg1: i32, %arg2: memref<16x32xf32, #tpu.memory_space<vmem>>, %arg3: memref<32x128xbf16, #tpu.memory_space<vmem>>, %arg4: memref<1x128xf32, #tpu.memory_space<vmem>>, %arg5: memref<32x128xbf16, #tpu.memory_space<vmem>>, %arg6: memref<1x128xf32, #tpu.memory_space<vmem>>, %arg7: memref<128x32xbf16, #tpu.memory_space<vmem>>, %arg8: memref<1x32xf32, #tpu.memory_space<vmem>>, %arg9: memref<16x32xf32, #tpu.memory_space<vmem>>, %arg10: memref<16x32xf32, #tpu.memory_space<vmem>>) attributes {dimension_semantics = [#tpu.dimension_semantics<parallel>, #tpu.dimension_semantics<arbitrary>], iteration_bounds = array<i64: 1, 1>, scalar_prefetch = 0 : i64, scratch_operands = 1 : i64, tpu.core_type = #tpu.core_type<tc>, window_params = [{transform_indices = @transform_0, window_bounds = array<i64: 16, 32>}, {transform_indices = @transform_1, window_bounds = array<i64: 32, 128>}, {transform_indices = @transform_2, window_bounds = array<i64: 1, 128>}, {transform_indices = @transform_3, window_bounds = array<i64: 32, 128>}, {transform_indices = @transform_4, window_bounds = array<i64: 1, 128>}, {transform_indices = @transform_5, window_bounds = array<i64: 128, 32>}, {pipeline_mode = #tpu.pipeline_mode<synchronous>, transform_indices = @transform_6, window_bounds = array<i64: 1, 32>}, {transform_indices = @transform_7, window_bounds = array<i64: 16, 32>}]} {
    %c0_i32 = arith.constant 0 : i32
    %0 = arith.cmpi eq, %arg1, %c0_i32 : i32
    %1 = arith.extui %0 : i1 to i32
    %c0_i32_0 = arith.constant 0 : i32
    %2 = arith.cmpi ne, %1, %c0_i32_0 : i32
    scf.if %2 {
      %cst_23 = arith.constant 0.000000e+00 : f32
      %33 = vector.broadcast %cst_23 : f32 to vector<16x32xf32>
      %c0_24 = arith.constant 0 : index
      %c0_25 = arith.constant 0 : index
      %34 = vector.load %arg10[%c0_24, %c0_25] : memref<16x32xf32, #tpu.memory_space<vmem>>, vector<16x32xf32>
      tpu.vector_store %arg10[%c0_24, %c0_25], %33 {strides = array<i32>} : memref<16x32xf32, #tpu.memory_space<vmem>>, vector<16x32xf32>,
    } else {
    }
    %c0 = arith.constant 0 : index
    %c0_1 = arith.constant 0 : index
    %3 = vector.load %arg2[%c0, %c0_1] : memref<16x32xf32, #tpu.memory_space<vmem>>, vector<16x32xf32>
    %4 = arith.truncf %3 : vector<16x32xf32> to vector<16x32xbf16>
    %c0_2 = arith.constant 0 : index
    %c0_3 = arith.constant 0 : index
    %5 = vector.load %arg3[%c0_2, %c0_3] : memref<32x128xbf16, #tpu.memory_space<vmem>>, vector<32x128xbf16>
    %cst = arith.constant dense<0.000000e+00> : vector<16x128xf32>
    %6 = tpu.matmul %4, %5, %cst {dimension_numbers = #tpu.dot_dimension_numbers<[1], [0], [0], [1], [0, 0, 1, 1], [], []>} : vector<16x32xbf16>, vector<32x128xbf16>, vector<16x128xf32> -> vector<16x128xf32>
    %c0_4 = arith.constant 0 : index
    %c0_5 = arith.constant 0 : index
    %7 = vector.load %arg4[%c0_4, %c0_5] : memref<1x128xf32, #tpu.memory_space<vmem>>, vector<1x128xf32>
    %8 = vector.broadcast %7 : vector<1x128xf32> to vector<16x128xf32>
    %9 = arith.addf %6, %8 : vector<16x128xf32>
    %c0_6 = arith.constant 0 : index
    %c0_7 = arith.constant 0 : index
    %10 = vector.load %arg5[%c0_6, %c0_7] : memref<32x128xbf16, #tpu.memory_space<vmem>>, vector<32x128xbf16>
    %cst_8 = arith.constant dense<0.000000e+00> : vector<16x128xf32>
    %11 = tpu.matmul %4, %10, %cst_8 {dimension_numbers = #tpu.dot_dimension_numbers<[1], [0], [0], [1], [0, 0, 1, 1], [], []>} : vector<16x32xbf16>, vector<32x128xbf16>, vector<16x128xf32> -> vector<16x128xf32>
    %c0_9 = arith.constant 0 : index
    %c0_10 = arith.constant 0 : index
    %12 = vector.load %arg6[%c0_9, %c0_10] : memref<1x128xf32, #tpu.memory_space<vmem>>, vector<1x128xf32>
    %13 = vector.broadcast %12 : vector<1x128xf32> to vector<16x128xf32>
    %14 = arith.addf %11, %13 : vector<16x128xf32>
    %cst_11 = arith.constant 5.000000e-01 : f32
    %15 = vector.broadcast %cst_11 : f32 to vector<16x128xf32>
    %16 = arith.mulf %15, %14 : vector<16x128xf32>
    %cst_12 = arith.constant 0.707106769 : f32
    %17 = vector.broadcast %cst_12 : f32 to vector<16x128xf32>
    %18 = arith.mulf %14, %17 : vector<16x128xf32>
    %19 = math.erf %18 : vector<16x128xf32>
    %cst_13 = arith.constant 1.000000e+00 : f32
    %20 = vector.broadcast %cst_13 : f32 to vector<16x128xf32>
    %21 = arith.addf %20, %19 : vector<16x128xf32>
    %22 = arith.mulf %16, %21 : vector<16x128xf32>
    %23 = arith.mulf %9, %22 : vector<16x128xf32>
    %c0_14 = arith.constant 0 : index
    %c0_15 = arith.constant 0 : index
    %24 = vector.load %arg10[%c0_14, %c0_15] : memref<16x32xf32, #tpu.memory_space<vmem>>, vector<16x32xf32>
    %25 = arith.truncf %23 : vector<16x128xf32> to vector<16x128xbf16>
    %c0_16 = arith.constant 0 : index
    %c0_17 = arith.constant 0 : index
    %26 = vector.load %arg7[%c0_16, %c0_17] : memref<128x32xbf16, #tpu.memory_space<vmem>>, vector<128x32xbf16>
    %cst_18 = arith.constant dense<0.000000e+00> : vector<16x32xf32>
    %27 = tpu.matmul %25, %26, %cst_18 {dimension_numbers = #tpu.dot_dimension_numbers<[1], [0], [0], [1], [0, 0, 1, 1], [], []>} : vector<16x128xbf16>, vector<128x32xbf16>, vector<16x32xf32> -> vector<16x32xf32>
    %28 = arith.addf %24, %27 : vector<16x32xf32>
    %c0_19 = arith.constant 0 : index
    %c0_20 = arith.constant 0 : index
    %29 = vector.load %arg10[%c0_19, %c0_20] : memref<16x32xf32, #tpu.memory_space<vmem>>, vector<16x32xf32>
    tpu.vector_store %arg10[%c0_19, %c0_20], %28 {strides = array<i32>} : memref<16x32xf32, #tpu.memory_space<vmem>>, vector<16x32xf32>,
    %c0_i32_21 = arith.constant 0 : i32
    %30 = arith.cmpi eq, %arg1, %c0_i32_21 : i32
    %31 = arith.extui %30 : i1 to i32
    %c0_i32_22 = arith.constant 0 : i32
    %32 = arith.cmpi ne, %31, %c0_i32_22 : i32
    scf.if %32 {
      %c0_23 = arith.constant 0 : index
      %c0_24 = arith.constant 0 : index
      %33 = vector.load %arg10[%c0_23, %c0_24] : memref<16x32xf32, #tpu.memory_space<vmem>>, vector<16x32xf32>
      %c0_25 = arith.constant 0 : index
      %c0_26 = arith.constant 0 : index
      %34 = vector.load %arg8[%c0_25, %c0_26] : memref<1x32xf32, #tpu.memory_space<vmem>>, vector<1x32xf32>
      %35 = vector.broadcast %34 : vector<1x32xf32> to vector<16x32xf32>
      %36 = arith.addf %33, %35 : vector<16x32xf32>
      %c0_27 = arith.constant 0 : index
      %c0_28 = arith.constant 0 : index
      %37 = vector.load %arg9[%c0_27, %c0_28] : memref<16x32xf32, #tpu.memory_space<vmem>>, vector<16x32xf32>
      tpu.vector_store %arg9[%c0_27, %c0_28], %36 {strides = array<i32>} : memref<16x32xf32, #tpu.memory_space<vmem>>, vector<16x32xf32>,
    } else {
    }
    return
  }
  func.func @transform_0(%arg0: i32, %arg1: i32) -> (i32, i32) {
    %c0_i32 = arith.constant 0 : i32
    %c0_i32_0 = arith.constant 0 : i32
    return %arg0, %c0_i32 : i32, i32
  }
  func.func @transform_1(%arg0: i32, %arg1: i32) -> (i32, i32) {
    %c0_i32 = arith.constant 0 : i32
    %c0_i32_0 = arith.constant 0 : i32
    return %c0_i32, %arg1 : i32, i32
  }
  func.func @transform_2(%arg0: i32, %arg1: i32) -> (i32, i32) {
    %c0_i32 = arith.constant 0 : i32
    %c0_i32_0 = arith.constant 0 : i32
    return %c0_i32, %arg1 : i32, i32
  }
  func.func @transform_3(%arg0: i32, %arg1: i32) -> (i32, i32) {
    %c0_i32 = arith.constant 0 : i32
    %c0_i32_0 = arith.constant 0 : i32
    return %c0_i32, %arg1 : i32, i32
  }
  func.func @transform_4(%arg0: i32, %arg1: i32) -> (i32, i32) {
    %c0_i32 = arith.constant 0 : i32
    %c0_i32_0 = arith.constant 0 : i32
    return %c0_i32, %arg1 : i32, i32
  }
  func.func @transform_5(%arg0: i32, %arg1: i32) -> (i32, i32) {
    %c0_i32 = arith.constant 0 : i32
    %c0_i32_0 = arith.constant 0 : i32
    return %arg1, %c0_i32 : i32, i32
  }
  func.func @transform_6(%arg0: i32, %arg1: i32) -> (i32, i32) {
    %c0_i32 = arith.constant 0 : i32
    %c0_i32_0 = arith.constant 0 : i32
    %c0_i32_1 = arith.constant 0 : i32
    return %c0_i32, %c0_i32_0 : i32, i32
  }
  func.func @transform_7(%arg0: i32, %arg1: i32) -> (i32, i32) {
    %c0_i32 = arith.constant 0 : i32
    %c0_i32_0 = arith.constant 0 : i32
    return %arg0, %c0_i32 : i32, i32
  }
}

</mosaic_0001>

<llo_original>
// kernel: tpu_custom_call.1
$region0: #{tpu_custom_call.1}
  #allocation0 [shape = 'u32[]', space=smem, size = 0x4, offset = 0x4, fixed_abs, tag = 'smem constant byte address 0x4 - core index']
  #allocation1 [shape = 'u32[144,128]{1,0:T(1,128)}', space=vmem, size = 0x12000, scoped, tag = 'internal scratch']
  #allocation2 [shape = 'f32[16,32]{1,0:T(8,128)}', space=vmem, size = 0x2000, scoped, tag = 'scratch operand']
  %s0 = inlined_call_operand.vmem [shape: f32[16,32], index: 0, kind: input, shape index: {}]
  %s1 = inlined_call_operand.vmem [shape: bf16[32,128], index: 1, kind: input, shape index: {}]
  %s2 = inlined_call_operand.vmem [shape: f32[1,128], index: 2, kind: input, shape index: {}]
  %s3 = inlined_call_operand.vmem [shape: bf16[32,128], index: 3, kind: input, shape index: {}]
  %s4 = inlined_call_operand.vmem [shape: f32[1,128], index: 4, kind: input, shape index: {}]
  %s5 = inlined_call_operand.vmem [shape: bf16[128,32], index: 5, kind: input, shape index: {}]
  %s6 = inlined_call_operand.vmem [shape: f32[1,32], index: 6, kind: input, shape index: {}]
  %s7 = inlined_call_operand.hbm [shape: f32[16,32], index: 7, kind: output, shape index: {}]
  %s8 = sld [smem:[#allocation0]]
  $region46: #{tpu_custom_call.1} parent=0
    _
  %s10 = ssub.s32 1, %s8
  %s11 = scalar_select 0, %s10, %s8
  $region1: #{tpu_custom_call.1} parent=0
    #allocation3 [shape = 'u8[8192]{0}', space=vmem, size = 0x2000, scoped, tag = 'output window, operand 0, single buffered']
    #allocation4 [shape = 's32[1]{0}', space=sflag, size = 0x4, scoped, tag = 'scoped memory for tpu_custom_call.1']
    %12 = vsyncpa [#allocation4], 0
    // Predicated region
    $region2: #{tpu_custom_call.1} parent=1 // pred_check
      _
    $region3: #{tpu_custom_call.1} parent=1 // pred_check_branch
      %14 = sbr.rel (0) target = $region5
    $region4: #{tpu_custom_call.1} parent=1 // pred_region
      _
    $region5: #{tpu_custom_call.1} parent=1 // pred_fallthru
      _
    // Predicated region
    $region6: #{tpu_custom_call.1} parent=1 // pred_check
      _
    $region7: #{tpu_custom_call.1} parent=1 // pred_check_branch
      %16 = sbr.rel (0) target = $region9
    $region8: #{tpu_custom_call.1} parent=1 // pred_region
      _
    $region9: #{tpu_custom_call.1} parent=1 // pred_fallthru
      _
    // Predicated region
    $region10: #{tpu_custom_call.1} parent=1 // pred_check
      _
    $region11: #{tpu_custom_call.1} parent=1 // pred_check_branch
      %18 = sbr.rel (0) target = $region13
    $region12: #{tpu_custom_call.1} parent=1 // pred_region
      _
    $region13: #{tpu_custom_call.1} parent=1 // pred_fallthru
      _
    // Predicated region
    $region14: #{tpu_custom_call.1} parent=1 // pred_check
      _
    $region15: #{tpu_custom_call.1} parent=1 // pred_check_branch
      %20 = sbr.rel (0) target = $region17
    $region16: #{tpu_custom_call.1} parent=1 // pred_region
      _
    $region17: #{tpu_custom_call.1} parent=1 // pred_fallthru
      _
    // Predicated region
    $region18: #{tpu_custom_call.1} parent=1 // pred_check
      _
    $region19: #{tpu_custom_call.1} parent=1 // pred_check_branch
      %22 = sbr.rel (0) target = $region21
    $region20: #{tpu_custom_call.1} parent=1 // pred_region
      _
    $region21: #{tpu_custom_call.1} parent=1 // pred_fallthru
      _
    // Predicated region
    $region22: #{tpu_custom_call.1} parent=1 // pred_check
      _
    $region23: #{tpu_custom_call.1} parent=1 // pred_check_branch
      %24 = sbr.rel (0) target = $region25
    $region24: #{tpu_custom_call.1} parent=1 // pred_region
      _
    $region25: #{tpu_custom_call.1} parent=1 // pred_fallthru
      _
    // Predicated region
    $region26: #{tpu_custom_call.1} parent=1 // pred_check
      _
    $region27: #{tpu_custom_call.1} parent=1 // pred_check_branch
      %26 = sbr.rel (0) target = $region29
    $region28: #{tpu_custom_call.1} parent=1 // pred_region
      _
    $region29: #{tpu_custom_call.1} parent=1 // pred_fallthru
      _
    %p28 = scmp.eq.s32.totalorder 0, 0
    // Predicated region
    $region30: #{tpu_custom_call.1} parent=1 // pred_check
      %p29 = pneg %p28
    $region31: #{tpu_custom_call.1} parent=1 // pred_check_branch
      %31 = sbr.rel (%p29) target = $region33
    $region32: #{tpu_custom_call.1} parent=1 // pred_region
      %vm32 = vcmask 261120
      %33 = vst.msk [vmem:[#allocation2] sm:$0xff] %vm32, 0.0
      %34 = vst.msk [vmem:[#allocation2 + $0x8] sm:$0xff] %vm32, 0.0
    $region33: #{tpu_custom_call.1} parent=1 // pred_fallthru
      _
    %v35 = vld [vmem:[%s0] sm:$0xff]
    %v36 = vld [vmem:[%s0 + $0x8] sm:$0xff]
    %v37 = vpack.c.bf16 %v36, %v35
    %v38 = vld [vmem:[%s1] sm:$0xf]
    %v39 = vld [vmem:[%s1 + $0x4] sm:$0xf]
    %v40 = vld [vmem:[%s1 + $0x8] sm:$0xf]
    %v41 = vld [vmem:[%s1 + $0xc] sm:$0xf]
    %v42 = vld [vmem:[%s2] sm:$0x1]
    %v44 = vlaneseq
    %v45 = vshrl.u32 %v44, 7
    %v46 = vsub.s32 0, %v45
    %v47 = vrot.slane %v42, %v46
    %v53 = vunpack.c.l.b16 %v38
    %v54 = vunpack.c.l.b16 %v39
    %v55 = vunpack.c.l.b16 %v40
    %v56 = vunpack.c.l.b16 %v41
    %v57 = vpack.c.b16 %v54, %v53
    %v58 = vpack.c.b16 %v56, %v55
    %vm61 = vcmask 261120
    %v63 = vsel %vm61, %v37, 0
    %65 = vmatprep.subr.bf16.mxu0 0
    %66 = vmatpush1.bf16.msra.mxu0 %v57
    %67 = vmatprep.subr.bf16.mxu0 0
    %68 = vmatpush1.bf16.msra.mxu0 %v58
    %69 = vmatprep.subr.bf16.mxu0 0
    %70 = vmatpush1.bf16.msra.mxu0 0
    %71 = vmatprep.subr.bf16.mxu0 0
    %72 = vmatpush1.bf16.msra.mxu0 0
    %73 = vmatprep.subr.bf16.mxu0 0
    %74 = vmatpush1.bf16.msra.mxu0 0
    %75 = vmatprep.subr.bf16.mxu0 0
    %76 = vmatpush1.bf16.msra.mxu0 0
    %77 = vmatprep.subr.bf16.mxu0 0
    %78 = vmatpush1.bf16.msra.mxu0 0
    %79 = vmatprep.subr.bf16.mxu0 0
    %80 = vmatpush1.bf16.msra.mxu0 0
    %81 = vmatprep.subr.bf16.mxu0 0
    %82 = vmatpush1.bf16.msra.mxu0 0
    %83 = vmatprep.subr.bf16.mxu0 0
    %84 = vmatpush1.bf16.msra.mxu0 0
    %85 = vmatprep.subr.bf16.mxu0 0
    %86 = vmatpush1.bf16.msra.mxu0 0
    %87 = vmatprep.subr.bf16.mxu0 0
    %88 = vmatpush1.bf16.msra.mxu0 0
    %89 = vmatprep.subr.bf16.mxu0 0
    %90 = vmatpush1.bf16.msra.mxu0 0
    %91 = vmatprep.subr.bf16.mxu0 0
    %92 = vmatpush1.bf16.msra.mxu0 0
    %93 = vmatprep.subr.bf16.mxu0 0
    %94 = vmatpush1.bf16.msra.mxu0 0
    %95 = vmatprep.subr.bf16.mxu0 0
    %96 = vmatpush1.bf16.msra.mxu0 0
    %97 = vmatprep.mubr.bf16.mxu0 0
    %98 = vmatmul.mubr.bf16.gmra.mrb[0].mxu0 %v63
    %v99 = vpop.f32.mrb[0].mxu0
    %v100 = vadd.f32 %v47, %v99
    %v101 = vpop.f32.mrb[0].mxu0
    %v102 = vpop.f32.mrb[0].mxu0
    %v103 = vadd.f32 %v47, %v102
    %v104 = vpop.f32.mrb[0].mxu0
    %105 = vdwg.mxu0
    %v106 = vld [vmem:[%s3] sm:$0xf]
    %v107 = vld [vmem:[%s3 + $0x4] sm:$0xf]
    %v108 = vld [vmem:[%s3 + $0x8] sm:$0xf]
    %v109 = vld [vmem:[%s3 + $0xc] sm:$0xf]
    %v110 = vld [vmem:[%s4] sm:$0x1]
    %v112 = vlaneseq
    %v113 = vshrl.u32 %v112, 7
    %v114 = vsub.s32 0, %v113
    %v115 = vrot.slane %v110, %v114
    %v121 = vunpack.c.l.b16 %v106
    %v122 = vunpack.c.l.b16 %v107
    %v123 = vunpack.c.l.b16 %v108
    %v124 = vunpack.c.l.b16 %v109
    %v125 = vpack.c.b16 %v122, %v121
    %v126 = vpack.c.b16 %v124, %v123
    %129 = vmatprep.subr.bf16.mxu0 0
    %130 = vmatpush1.bf16.msra.mxu0 %v125
    %131 = vmatprep.subr.bf16.mxu0 0
    %132 = vmatpush1.bf16.msra.mxu0 %v126
    %133 = vmatprep.subr.bf16.mxu0 0
    %134 = vmatpush1.bf16.msra.mxu0 0
    %135 = vmatprep.subr.bf16.mxu0 0
    %136 = vmatpush1.bf16.msra.mxu0 0
    %137 = vmatprep.subr.bf16.mxu0 0
    %138 = vmatpush1.bf16.msra.mxu0 0
    %139 = vmatprep.subr.bf16.mxu0 0
    %140 = vmatpush1.bf16.msra.mxu0 0
    %141 = vmatprep.subr.bf16.mxu0 0
    %142 = vmatpush1.bf16.msra.mxu0 0
    %143 = vmatprep.subr.bf16.mxu0 0
    %144 = vmatpush1.bf16.msra.mxu0 0
    %145 = vmatprep.subr.bf16.mxu0 0
    %146 = vmatpush1.bf16.msra.mxu0 0
    %147 = vmatprep.subr.bf16.mxu0 0
    %148 = vmatpush1.bf16.msra.mxu0 0
    %149 = vmatprep.subr.bf16.mxu0 0
    %150 = vmatpush1.bf16.msra.mxu0 0
    %151 = vmatprep.subr.bf16.mxu0 0
    %152 = vmatpush1.bf16.msra.mxu0 0
    %153 = vmatprep.subr.bf16.mxu0 0
    %154 = vmatpush1.bf16.msra.mxu0 0
    %155 = vmatprep.subr.bf16.mxu0 0
    %156 = vmatpush1.bf16.msra.mxu0 0
    %157 = vmatprep.subr.bf16.mxu0 0
    %158 = vmatpush1.bf16.msra.mxu0 0
    %159 = vmatprep.subr.bf16.mxu0 0
    %160 = vmatpush1.bf16.msra.mxu0 0
    %161 = vmatprep.mubr.bf16.mxu0 0
    %162 = vmatmul.mubr.bf16.gmra.mrb[0].mxu0 %v63
    %v163 = vpop.f32.mrb[0].mxu0
    %v164 = vadd.f32 %v115, %v163
    %v165 = vpop.f32.mrb[0].mxu0
    %v166 = vpop.f32.mrb[0].mxu0
    %v167 = vadd.f32 %v115, %v166
    %v168 = vpop.f32.mrb[0].mxu0
    %169 = vdwg.mxu0
    %v170 = vmul.f32 %v164, 0.5
    %v171 = vmul.f32 %v167, 0.5
    %v172 = vmul.f32 %v164, 0.70710677
    %v173 = vmul.f32 %v167, 0.70710677
    %v174 = verf.f32.pop %v172
    %v175 = verf.f32.pop %v173
    %v176 = vadd.f32 %v174, 1.0
    %v177 = vadd.f32 %v175, 1.0
    %v178 = vmul.f32 %v170, %v176
    %v179 = vmul.f32 %v171, %v177
    %v180 = vmul.f32 %v100, %v178
    %v181 = vmul.f32 %v103, %v179
    %v182 = vld [vmem:[#allocation2] sm:$0xff]
    %v183 = vld [vmem:[#allocation2 + $0x8] sm:$0xff]
    %v184 = vpack.c.bf16 %v181, %v180
    %v185 = vld [vmem:[%s5] sm:$0xf]
    %v186 = vld [vmem:[%s5 + $0x4] sm:$0xf]
    %v187 = vld [vmem:[%s5 + $0x8] sm:$0xf]
    %v188 = vld [vmem:[%s5 + $0xc] sm:$0xf]
    %v189 = vld [vmem:[%s5 + $0x10] sm:$0xf]
    %v190 = vld [vmem:[%s5 + $0x14] sm:$0xf]
    %v191 = vld [vmem:[%s5 + $0x18] sm:$0xf]
    %v192 = vld [vmem:[%s5 + $0x1c] sm:$0xf]
    %v193 = vld [vmem:[%s5 + $0x20] sm:$0xf]
    %v194 = vld [vmem:[%s5 + $0x24] sm:$0xf]
    %v195 = vld [vmem:[%s5 + $0x28] sm:$0xf]
    %v196 = vld [vmem:[%s5 + $0x2c] sm:$0xf]
    %v197 = vld [vmem:[%s5 + $0x30] sm:$0xf]
    %v198 = vld [vmem:[%s5 + $0x34] sm:$0xf]
    %v199 = vld [vmem:[%s5 + $0x38] sm:$0xf]
    %v200 = vld [vmem:[%s5 + $0x3c] sm:$0xf]
    %v217 = vunpack.c.l.b16 %v185
    %v218 = vunpack.c.l.b16 %v186
    %v219 = vunpack.c.l.b16 %v187
    %v220 = vunpack.c.l.b16 %v188
    %v221 = vunpack.c.l.b16 %v189
    %v222 = vunpack.c.l.b16 %v190
    %v223 = vunpack.c.l.b16 %v191
    %v224 = vunpack.c.l.b16 %v192
    %v225 = vunpack.c.l.b16 %v193
    %v226 = vunpack.c.l.b16 %v194
    %v227 = vunpack.c.l.b16 %v195
    %v228 = vunpack.c.l.b16 %v196
    %v229 = vunpack.c.l.b16 %v197
    %v230 = vunpack.c.l.b16 %v198
    %v231 = vunpack.c.l.b16 %v199
    %v232 = vunpack.c.l.b16 %v200
    %v233 = vpack.c.b16 %v218, %v217
    %v234 = vpack.c.b16 %v220, %v219
    %v235 = vpack.c.b16 %v222, %v221
    %v236 = vpack.c.b16 %v224, %v223
    %v237 = vpack.c.b16 %v226, %v225
    %v238 = vpack.c.b16 %v228, %v227
    %v239 = vpack.c.b16 %v230, %v229
    %v240 = vpack.c.b16 %v232, %v231
    %249 = vmatprep.subr.bf16.mxu0 0
    %250 = vmatpush1.bf16.msra.mxu0 %v233
    %251 = vmatprep.subr.bf16.mxu0 0
    %252 = vmatpush1.bf16.msra.mxu0 %v234
    %253 = vmatprep.subr.bf16.mxu0 0
    %254 = vmatpush1.bf16.msra.mxu0 %v235
    %255 = vmatprep.subr.bf16.mxu0 0
    %256 = vmatpush1.bf16.msra.mxu0 %v236
    %257 = vmatprep.subr.bf16.mxu0 0
    %258 = vmatpush1.bf16.msra.mxu0 %v237
    %259 = vmatprep.subr.bf16.mxu0 0
    %260 = vmatpush1.bf16.msra.mxu0 %v238
    %261 = vmatprep.subr.bf16.mxu0 0
    %262 = vmatpush1.bf16.msra.mxu0 %v239
    %263 = vmatprep.subr.bf16.mxu0 0
    %264 = vmatpush1.bf16.msra.mxu0 %v240
    %265 = vmatprep.subr.bf16.mxu0 0
    %266 = vmatpush1.bf16.msra.mxu0 0
    %267 = vmatprep.subr.bf16.mxu0 0
    %268 = vmatpush1.bf16.msra.mxu0 0
    %269 = vmatprep.subr.bf16.mxu0 0
    %270 = vmatpush1.bf16.msra.mxu0 0
    %271 = vmatprep.subr.bf16.mxu0 0
    %272 = vmatpush1.bf16.msra.mxu0 0
    %273 = vmatprep.subr.bf16.mxu0 0
    %274 = vmatpush1.bf16.msra.mxu0 0
    %275 = vmatprep.subr.bf16.mxu0 0
    %276 = vmatpush1.bf16.msra.mxu0 0
    %277 = vmatprep.subr.bf16.mxu0 0
    %278 = vmatpush1.bf16.msra.mxu0 0
    %279 = vmatprep.subr.bf16.mxu0 0
    %280 = vmatpush1.bf16.msra.mxu0 0
    %281 = vmatprep.mubr.bf16.mxu0 0
    %282 = vmatmul.mubr.bf16.gmra.mrb[0].mxu0 %v184
    %v283 = vpop.f32.mrb[0].mxu0
    %v284 = vadd.f32 0.0, %v283
    %v285 = vpop.f32.mrb[0].mxu0
    %v286 = vpop.f32.mrb[0].mxu0
    %v287 = vadd.f32 0.0, %v286
    %v288 = vpop.f32.mrb[0].mxu0
    %289 = vdwg.mxu0
    %v290 = vadd.f32 %v182, %v284
    %v291 = vadd.f32 %v183, %v287
    %292 = vst.msk [vmem:[#allocation2] sm:$0xff] %vm61, %v290
    %293 = vst.msk [vmem:[#allocation2 + $0x8] sm:$0xff] %vm61, %v291
    // Predicated region
    $region34: #{tpu_custom_call.1} parent=1 // pred_check
      %p294 = pneg %p28
    $region35: #{tpu_custom_call.1} parent=1 // pred_check_branch
      %296 = sbr.rel (%p294) target = $region37
    $region36: #{tpu_custom_call.1} parent=1 // pred_region
      %v297 = vld [vmem:[#allocation2] sm:$0xff]
      %v298 = vld [vmem:[#allocation2 + $0x8] sm:$0xff]
      %v299 = vld [vmem:[%s6] sm:$0x1]
      %v301 = vlaneseq
      %v302 = vshrl.u32 %v301, 7
      %v303 = vsub.s32 0, %v302
      %v304 = vrot.slane %v299, %v303
      %v306 = vadd.f32 %v297, %v304
      %v307 = vadd.f32 %v298, %v304
      %308 = vst.msk [vmem:[#allocation3] sm:$0xff] %vm61, %v306
      %309 = vst.msk [vmem:[#allocation3 + $0x8] sm:$0xff] %vm61, %v307
    $region37: #{tpu_custom_call.1} parent=1 // pred_fallthru
      _
    // Predicated region
    $region38: #{tpu_custom_call.1} parent=1 // pred_check
      _
    $region39: #{tpu_custom_call.1} parent=1 // pred_check_branch
      %311 = sbr.rel (0) target = $region41
    $region40: #{tpu_custom_call.1} parent=1 // pred_region
      %s313 = ssub.s32 256, 256
      %314 = vsyncadd [#allocation4], %s313
      %s315 = sshll.u32 [#allocation3], 4
      %s316 = int_to_ptr.vmem [resolvable:$true] %s315
      %321 = dma.vmem_to_hbm [thread:$0]  %s316, 256, %s7, [#allocation4], 128, 128, 8
    $region41: #{tpu_custom_call.1} parent=1 // pred_fallthru
      _
    // Predicated region
    $region42: #{tpu_custom_call.1} parent=1 // pred_check
      _
    $region43: #{tpu_custom_call.1} parent=1 // pred_check_branch
      %323 = sbr.rel (0) target = $region45
    $region44: #{tpu_custom_call.1} parent=1 // pred_region
      %324 = dma.done [#allocation4], 256
    $region45: #{tpu_custom_call.1} parent=1 // pred_fallthru
      _
    %325 = vsyncpa [#allocation4], 1

// kernel: tpu_custom_call.1
$region0: #{tpu_custom_call.1}
  #allocation0 [shape = 'u32[]', space=smem, size = 0x4, offset = 0x4, fixed_abs, tag = 'smem constant byte address 0x4 - core index']
  #allocation1 [shape = 'u32[144,128]{1,0:T(1,128)}', space=vmem, size = 0x12000, scoped, tag = 'internal scratch']
  #allocation2 [shape = 'f32[16,32]{1,0:T(8,128)}', space=vmem, size = 0x2000, scoped, tag = 'scratch operand']
  %s0 = inlined_call_operand.vmem [shape: f32[16,32], index: 0, kind: input, shape index: {}]
  %s1 = inlined_call_operand.vmem [shape: bf16[32,128], index: 1, kind: input, shape index: {}]
  %s2 = inlined_call_operand.vmem [shape: f32[1,128], index: 2, kind: input, shape index: {}]
  %s3 = inlined_call_operand.vmem [shape: bf16[32,128], index: 3, kind: input, shape index: {}]
  %s4 = inlined_call_operand.vmem [shape: f32[1,128], index: 4, kind: input, shape index: {}]
  %s5 = inlined_call_operand.vmem [shape: bf16[128,32], index: 5, kind: input, shape index: {}]
  %s6 = inlined_call_operand.vmem [shape: f32[1,32], index: 6, kind: input, shape index: {}]
  %s7 = inlined_call_operand.hbm [shape: f32[16,32], index: 7, kind: output, shape index: {}]
  %s8 = sld [smem:[#allocation0]]
  $region46: #{tpu_custom_call.1} parent=0
    _
  %s10 = ssub.s32 1, %s8
  %s11 = scalar_select 0, %s10, %s8
  $region1: #{tpu_custom_call.1} parent=0
    #allocation3 [shape = 'u8[8192]{0}', space=vmem, size = 0x2000, scoped, tag = 'output window, operand 0, single buffered']
    #allocation4 [shape = 's32[1]{0}', space=sflag, size = 0x4, scoped, tag = 'scoped memory for tpu_custom_call.1']
    %12 = vsyncpa [#allocation4], 0
    // Predicated region
    $region2: #{tpu_custom_call.1} parent=1 // pred_check
      _
    $region3: #{tpu_custom_call.1} parent=1 // pred_check_branch
      %14 = sbr.rel (0) target = $region5
    $region4: #{tpu_custom_call.1} parent=1 // pred_region
      _
    $region5: #{tpu_custom_call.1} parent=1 // pred_fallthru
      _
    // Predicated region
    $region6: #{tpu_custom_call.1} parent=1 // pred_check
      _
    $region7: #{tpu_custom_call.1} parent=1 // pred_check_branch
      %16 = sbr.rel (0) target = $region9
    $region8: #{tpu_custom_call.1} parent=1 // pred_region
      _
    $region9: #{tpu_custom_call.1} parent=1 // pred_fallthru
      _
    // Predicated region
    $region10: #{tpu_custom_call.1} parent=1 // pred_check
      _
    $region11: #{tpu_custom_call.1} parent=1 // pred_check_branch
      %18 = sbr.rel (0) target = $region13
    $region12: #{tpu_custom_call.1} parent=1 // pred_region
      _
    $region13: #{tpu_custom_call.1} parent=1 // pred_fallthru
      _
    // Predicated region
    $region14: #{tpu_custom_call.1} parent=1 // pred_check
      _
    $region15: #{tpu_custom_call.1} parent=1 // pred_check_branch
      %20 = sbr.rel (0) target = $region17
    $region16: #{tpu_custom_call.1} parent=1 // pred_region
      _
    $region17: #{tpu_custom_call.1} parent=1 // pred_fallthru
      _
    // Predicated region
    $region18: #{tpu_custom_call.1} parent=1 // pred_check
      _
    $region19: #{tpu_custom_call.1} parent=1 // pred_check_branch
      %22 = sbr.rel (0) target = $region21
    $region20: #{tpu_custom_call.1} parent=1 // pred_region
      _
    $region21: #{tpu_custom_call.1} parent=1 // pred_fallthru
      _
    // Predicated region
    $region22: #{tpu_custom_call.1} parent=1 // pred_check
      _
    $region23: #{tpu_custom_call.1} parent=1 // pred_check_branch
      %24 = sbr.rel (0) target = $region25
    $region24: #{tpu_custom_call.1} parent=1 // pred_region
      _
    $region25: #{tpu_custom_call.1} parent=1 // pred_fallthru
      _
    // Predicated region
    $region26: #{tpu_custom_call.1} parent=1 // pred_check
      _
    $region27: #{tpu_custom_call.1} parent=1 // pred_check_branch
      %26 = sbr.rel (0) target = $region29
    $region28: #{tpu_custom_call.1} parent=1 // pred_region
      _
    $region29: #{tpu_custom_call.1} parent=1 // pred_fallthru
      _
    %p28 = scmp.eq.s32.totalorder 0, 0
    // Predicated region
    $region30: #{tpu_custom_call.1} parent=1 // pred_check
      %p29 = pneg %p28
    $region31: #{tpu_custom_call.1} parent=1 // pred_check_branch
      %31 = sbr.rel (%p29) target = $region33
    $region32: #{tpu_custom_call.1} parent=1 // pred_region
      %vm32 = vcmask 261120
      %33 = vst.msk [vmem:[#allocation2] sm:$0xff] %vm32, 0.0
      %34 = vst.msk [vmem:[#allocation2 + $0x8] sm:$0xff] %vm32, 0.0
    $region33: #{tpu_custom_call.1} parent=1 // pred_fallthru
      _
    %v35 = vld [vmem:[%s0] sm:$0xff]
    %v36 = vld [vmem:[%s0 + $0x8] sm:$0xff]
    %v37 = vpack.c.bf16 %v36, %v35
    %v38 = vld [vmem:[%s1] sm:$0xf]
    %v39 = vld [vmem:[%s1 + $0x4] sm:$0xf]
    %v40 = vld [vmem:[%s1 + $0x8] sm:$0xf]
    %v41 = vld [vmem:[%s1 + $0xc] sm:$0xf]
    %v42 = vld [vmem:[%s2] sm:$0x1]
    %v44 = vlaneseq
    %v45 = vshrl.u32 %v44, 7
    %v46 = vsub.s32 0, %v45
    %v47 = vrot.slane %v42, %v46
    %v53 = vunpack.c.l.b16 %v38
    %v54 = vunpack.c.l.b16 %v39
    %v55 = vunpack.c.l.b16 %v40
    %v56 = vunpack.c.l.b16 %v41
    %v57 = vpack.c.b16 %v54, %v53
    %v58 = vpack.c.b16 %v56, %v55
    %vm61 = vcmask 261120
    %v63 = vsel %vm61, %v37, 0
    %65 = vmatprep.subr.bf16.mxu0 0
    %66 = vmatpush1.bf16.msra.mxu0 %v57
    %67 = vmatprep.subr.bf16.mxu0 0
    %68 = vmatpush1.bf16.msra.mxu0 %v58
    %69 = vmatprep.subr.bf16.mxu0 0
    %70 = vmatpush1.bf16.msra.mxu0 0
    %71 = vmatprep.subr.bf16.mxu0 0
    %72 = vmatpush1.bf16.msra.mxu0 0
    %73 = vmatprep.subr.bf16.mxu0 0
    %74 = vmatpush1.bf16.msra.mxu0 0
    %75 = vmatprep.subr.bf16.mxu0 0
    %76 = vmatpush1.bf16.msra.mxu0 0
    %77 = vmatprep.subr.bf16.mxu0 0
    %78 = vmatpush1.bf16.msra.mxu0 0
    %79 = vmatprep.subr.bf16.mxu0 0
    %80 = vmatpush1.bf16.msra.mxu0 0
    %81 = vmatprep.subr.bf16.mxu0 0
    %82 = vmatpush1.bf16.msra.mxu0 0
    %83 = vmatprep.subr.bf16.mxu0 0
    %84 = vmatpush1.bf16.msra.mxu0 0
    %85 = vmatprep.subr.bf16.mxu0 0
    %86 = vmatpush1.bf16.msra.mxu0 0
    %87 = vmatprep.subr.bf16.mxu0 0
    %88 = vmatpush1.bf16.msra.mxu0 0
    %89 = vmatprep.subr.bf16.mxu0 0
    %90 = vmatpush1.bf16.msra.mxu0 0
    %91 = vmatprep.subr.bf16.mxu0 0
    %92 = vmatpush1.bf16.msra.mxu0 0
    %93 = vmatprep.subr.bf16.mxu0 0
    %94 = vmatpush1.bf16.msra.mxu0 0
    %95 = vmatprep.subr.bf16.mxu0 0
    %96 = vmatpush1.bf16.msra.mxu0 0
    %97 = vmatprep.mubr.bf16.mxu0 0
    %98 = vmatmul.mubr.bf16.gmra.mrb[0].mxu0 %v63
    %v99 = vpop.f32.mrb[0].mxu0
    %v100 = vadd.f32 %v47, %v99
    %v101 = vpop.f32.mrb[0].mxu0
    %v102 = vpop.f32.mrb[0].mxu0
    %v103 = vadd.f32 %v47, %v102
    %v104 = vpop.f32.mrb[0].mxu0
    %105 = vdwg.mxu0
    %v106 = vld [vmem:[%s3] sm:$0xf]
    %v107 = vld [vmem:[%s3 + $0x4] sm:$0xf]
    %v108 = vld [vmem:[%s3 + $0x8] sm:$0xf]
    %v109 = vld [vmem:[%s3 + $0xc] sm:$0xf]
    %v110 = vld [vmem:[%s4] sm:$0x1]
    %v112 = vlaneseq
    %v113 = vshrl.u32 %v112, 7
    %v114 = vsub.s32 0, %v113
    %v115 = vrot.slane %v110, %v114
    %v121 = vunpack.c.l.b16 %v106
    %v122 = vunpack.c.l.b16 %v107
    %v123 = vunpack.c.l.b16 %v108
    %v124 = vunpack.c.l.b16 %v109
    %v125 = vpack.c.b16 %v122, %v121
    %v126 = vpack.c.b16 %v124, %v123
    %129 = vmatprep.subr.bf16.mxu0 0
    %130 = vmatpush1.bf16.msra.mxu0 %v125
    %131 = vmatprep.subr.bf16.mxu0 0
    %132 = vmatpush1.bf16.msra.mxu0 %v126
    %133 = vmatprep.subr.bf16.mxu0 0
    %134 = vmatpush1.bf16.msra.mxu0 0
    %135 = vmatprep.subr.bf16.mxu0 0
    %136 = vmatpush1.bf16.msra.mxu0 0
    %137 = vmatprep.subr.bf16.mxu0 0
    %138 = vmatpush1.bf16.msra.mxu0 0
    %139 = vmatprep.subr.bf16.mxu0 0
    %140 = vmatpush1.bf16.msra.mxu0 0
    %141 = vmatprep.subr.bf16.mxu0 0
    %142 = vmatpush1.bf16.msra.mxu0 0
    %143 = vmatprep.subr.bf16.mxu0 0
    %144 = vmatpush1.bf16.msra.mxu0 0
    %145 = vmatprep.subr.bf16.mxu0 0
    %146 = vmatpush1.bf16.msra.mxu0 0
    %147 = vmatprep.subr.bf16.mxu0 0
    %148 = vmatpush1.bf16.msra.mxu0 0
    %149 = vmatprep.subr.bf16.mxu0 0
    %150 = vmatpush1.bf16.msra.mxu0 0
    %151 = vmatprep.subr.bf16.mxu0 0
    %152 = vmatpush1.bf16.msra.mxu0 0
    %153 = vmatprep.subr.bf16.mxu0 0
    %154 = vmatpush1.bf16.msra.mxu0 0
    %155 = vmatprep.subr.bf16.mxu0 0
    %156 = vmatpush1.bf16.msra.mxu0 0
    %157 = vmatprep.subr.bf16.mxu0 0
    %158 = vmatpush1.bf16.msra.mxu0 0
    %159 = vmatprep.subr.bf16.mxu0 0
    %160 = vmatpush1.bf16.msra.mxu0 0
    %161 = vmatprep.mubr.bf16.mxu0 0
    %162 = vmatmul.mubr.bf16.gmra.mrb[0].mxu0 %v63
    %v163 = vpop.f32.mrb[0].mxu0
    %v164 = vadd.f32 %v115, %v163
    %v165 = vpop.f32.mrb[0].mxu0
    %v166 = vpop.f32.mrb[0].mxu0
    %v167 = vadd.f32 %v115, %v166
    %v168 = vpop.f32.mrb[0].mxu0
    %169 = vdwg.mxu0
    %v170 = vmul.f32 %v164, 0.5
    %v171 = vmul.f32 %v167, 0.5
    %v172 = vmul.f32 %v164, 0.70710677
    %v173 = vmul.f32 %v167, 0.70710677
    %v174 = verf.f32.pop %v172
    %v175 = verf.f32.pop %v173
    %v176 = vadd.f32 %v174, 1.0
    %v177 = vadd.f32 %v175, 1.0
    %v178 = vmul.f32 %v170, %v176
    %v179 = vmul.f32 %v171, %v177
    %v180 = vmul.f32 %v100, %v178
    %v181 = vmul.f32 %v103, %v179
    %v182 = vld [vmem:[#allocation2] sm:$0xff]
    %v183 = vld [vmem:[#allocation2 + $0x8] sm:$0xff]
    %v184 = vpack.c.bf16 %v181, %v180
    %v185 = vld [vmem:[%s5] sm:$0xf]
    %v186 = vld [vmem:[%s5 + $0x4] sm:$0xf]
    %v187 = vld [vmem:[%s5 + $0x8] sm:$0xf]
    %v188 = vld [vmem:[%s5 + $0xc] sm:$0xf]
    %v189 = vld [vmem:[%s5 + $0x10] sm:$0xf]
    %v190 = vld [vmem:[%s5 + $0x14] sm:$0xf]
    %v191 = vld [vmem:[%s5 + $0x18] sm:$0xf]
    %v192 = vld [vmem:[%s5 + $0x1c] sm:$0xf]
    %v193 = vld [vmem:[%s5 + $0x20] sm:$0xf]
    %v194 = vld [vmem:[%s5 + $0x24] sm:$0xf]
    %v195 = vld [vmem:[%s5 + $0x28] sm:$0xf]
    %v196 = vld [vmem:[%s5 + $0x2c] sm:$0xf]
    %v197 = vld [vmem:[%s5 + $0x30] sm:$0xf]
    %v198 = vld [vmem:[%s5 + $0x34] sm:$0xf]
    %v199 = vld [vmem:[%s5 + $0x38] sm:$0xf]
    %v200 = vld [vmem:[%s5 + $0x3c] sm:$0xf]
    %v217 = vunpack.c.l.b16 %v185
    %v218 = vunpack.c.l.b16 %v186
    %v219 = vunpack.c.l.b16 %v187
    %v220 = vunpack.c.l.b16 %v188
    %v221 = vunpack.c.l.b16 %v189
    %v222 = vunpack.c.l.b16 %v190
    %v223 = vunpack.c.l.b16 %v191
    %v224 = vunpack.c.l.b16 %v192
    %v225 = vunpack.c.l.b16 %v193
    %v226 = vunpack.c.l.b16 %v194
    %v227 = vunpack.c.l.b16 %v195
    %v228 = vunpack.c.l.b16 %v196
    %v229 = vunpack.c.l.b16 %v197
    %v230 = vunpack.c.l.b16 %v198
    %v231 = vunpack.c.l.b16 %v199
    %v232 = vunpack.c.l.b16 %v200
    %v233 = vpack.c.b16 %v218, %v217
    %v234 = vpack.c.b16 %v220, %v219
    %v235 = vpack.c.b16 %v222, %v221
    %v236 = vpack.c.b16 %v224, %v223
    %v237 = vpack.c.b16 %v226, %v225
    %v238 = vpack.c.b16 %v228, %v227
    %v239 = vpack.c.b16 %v230, %v229
    %v240 = vpack.c.b16 %v232, %v231
    %249 = vmatprep.subr.bf16.mxu0 0
    %250 = vmatpush1.bf16.msra.mxu0 %v233
    %251 = vmatprep.subr.bf16.mxu0 0
    %252 = vmatpush1.bf16.msra.mxu0 %v234
    %253 = vmatprep.subr.bf16.mxu0 0
    %254 = vmatpush1.bf16.msra.mxu0 %v235
    %255 = vmatprep.subr.bf16.mxu0 0
    %256 = vmatpush1.bf16.msra.mxu0 %v236
    %257 = vmatprep.subr.bf16.mxu0 0
    %258 = vmatpush1.bf16.msra.mxu0 %v237
    %259 = vmatprep.subr.bf16.mxu0 0
    %260 = vmatpush1.bf16.msra.mxu0 %v238
    %261 = vmatprep.subr.bf16.mxu0 0
    %262 = vmatpush1.bf16.msra.mxu0 %v239
    %263 = vmatprep.subr.bf16.mxu0 0
    %264 = vmatpush1.bf16.msra.mxu0 %v240
    %265 = vmatprep.subr.bf16.mxu0 0
    %266 = vmatpush1.bf16.msra.mxu0 0
    %267 = vmatprep.subr.bf16.mxu0 0
    %268 = vmatpush1.bf16.msra.mxu0 0
    %269 = vmatprep.subr.bf16.mxu0 0
    %270 = vmatpush1.bf16.msra.mxu0 0
    %271 = vmatprep.subr.bf16.mxu0 0
    %272 = vmatpush1.bf16.msra.mxu0 0
    %273 = vmatprep.subr.bf16.mxu0 0
    %274 = vmatpush1.bf16.msra.mxu0 0
    %275 = vmatprep.subr.bf16.mxu0 0
    %276 = vmatpush1.bf16.msra.mxu0 0
    %277 = vmatprep.subr.bf16.mxu0 0
    %278 = vmatpush1.bf16.msra.mxu0 0
    %279 = vmatprep.subr.bf16.mxu0 0
    %280 = vmatpush1.bf16.msra.mxu0 0
    %281 = vmatprep.mubr.bf16.mxu0 0
    %282 = vmatmul.mubr.bf16.gmra.mrb[0].mxu0 %v184
    %v283 = vpop.f32.mrb[0].mxu0
    %v284 = vadd.f32 0.0, %v283
    %v285 = vpop.f32.mrb[0].mxu0
    %v286 = vpop.f32.mrb[0].mxu0
    %v287 = vadd.f32 0.0, %v286
    %v288 = vpop.f32.mrb[0].mxu0
    %289 = vdwg.mxu0
    %v290 = vadd.f32 %v182, %v284
    %v291 = vadd.f32 %v183, %v287
    %292 = vst.msk [vmem:[#allocation2] sm:$0xff] %vm61, %v290
    %293 = vst.msk [vmem:[#allocation2 + $0x8] sm:$0xff] %vm61, %v291
    // Predicated region
    $region34: #{tpu_custom_call.1} parent=1 // pred_check
      %p294 = pneg %p28
    $region35: #{tpu_custom_call.1} parent=1 // pred_check_branch
      %296 = sbr.rel (%p294) target = $region37
    $region36: #{tpu_custom_call.1} parent=1 // pred_region
      %v297 = vld [vmem:[#allocation2] sm:$0xff]
      %v298 = vld [vmem:[#allocation2 + $0x8] sm:$0xff]
      %v299 = vld [vmem:[%s6] sm:$0x1]
      %v301 = vlaneseq
      %v302 = vshrl.u32 %v301, 7
      %v303 = vsub.s32 0, %v302
      %v304 = vrot.slane %v299, %v303
      %v306 = vadd.f32 %v297, %v304
      %v307 = vadd.f32 %v298, %v304
      %308 = vst.msk [vmem:[#allocation3] sm:$0xff] %vm61, %v306
      %309 = vst.msk [vmem:[#allocation3 + $0x8] sm:$0xff] %vm61, %v307
    $region37: #{tpu_custom_call.1} parent=1 // pred_fallthru
      _
    // Predicated region
    $region38: #{tpu_custom_call.1} parent=1 // pred_check
      _
    $region39: #{tpu_custom_call.1} parent=1 // pred_check_branch
      %311 = sbr.rel (0) target = $region41
    $region40: #{tpu_custom_call.1} parent=1 // pred_region
      %s313 = ssub.s32 256, 256
      %314 = vsyncadd [#allocation4], %s313
      %s315 = sshll.u32 [#allocation3], 4
      %s316 = int_to_ptr.vmem [resolvable:$true] %s315
      %321 = dma.vmem_to_hbm [thread:$0]  %s316, 256, %s7, [#allocation4], 128, 128, 8
    $region41: #{tpu_custom_call.1} parent=1 // pred_fallthru
      _
    // Predicated region
    $region42: #{tpu_custom_call.1} parent=1 // pred_check
      _
    $region43: #{tpu_custom_call.1} parent=1 // pred_check_branch
      %323 = sbr.rel (0) target = $region45
    $region44: #{tpu_custom_call.1} parent=1 // pred_region
      %324 = dma.done [#allocation4], 256
    $region45: #{tpu_custom_call.1} parent=1 // pred_fallthru
      _
    %325 = vsyncpa [#allocation4], 1

</llo_original>
